<compile_context>
chip_gen: v5e
topology: v5e:2x2
jax: 0.10.0
libtpu: 0.0.40
codegen_flags: <defaults>
</compile_context>

<pallas_src>
import functools

import jax
import jax.numpy as jnp
from jax import lax
from jax.experimental import pallas as pl
from jax.experimental.pallas import tpu as pltpu


def lstm_split_kernel(emb_ref, w_ih_ref, w_hh_ref, b_ref, w_out_ref, b_out_ref,
                      out_ref, h_all_ref):
    T = emb_ref.shape[0]
    H = w_hh_ref.shape[0]          # w_hh_cat: (H, 4H)

    # ---- Fused input projection for ALL timesteps --------------------------
    # bf16 operands on the MXU, f32 accumulate.  At these sizes the (T, 4H)
    # result is a single vreg, so it stays in vregs: no (T,4H) VMEM scratch and
    # no dynamic-sublane reload / scalar address math on the serial recurrence.
    # TODO(synk): for production T, chunk this over a "parallel" T grid axis
    # (Tc multiple of 256 on v6e, ~half that under v7x's 64 MiB VMEM, 128 on
    # v5e) and set vmem_limit_bytes explicitly.
    xproj = (
        jnp.dot(emb_ref[...], w_ih_ref[...], preferred_element_type=jnp.float32)
        + b_ref[...]
    )

    # Recurrent weights loaded once; kept f32 (the recurrence is latency-bound,
    # bf16 buys little on the serial h->h chain).
    # TODO(synk): hold w_hh resident in the MXU across the recurrence via
    # pltpu.matmul_push_rhs / matmul_acc_lhs / matmul_pop to drop the per-step
    # RHS push from the serial chain (MRB in-place accumulate on v7x).
    w_hh = w_hh_ref[...]

    h = jnp.zeros((1, H), jnp.float32)
    c = jnp.zeros((1, H), jnp.float32)

    # Static Python unroll: every xproj row / gate slice is a static view and
    # the LLO scheduler sees the whole serial chain.
    # TODO(synk): for production T switch to lax.fori_loop(..., unroll=4..8).
    for t in range(T):
        # One fused recurrent matmul per step: (1, H) x (H, 4H) -> (1, 4H).
        gates = xproj[t:t + 1, :] + jnp.dot(
            h, w_hh, preferred_element_type=jnp.float32)
        # Two full-width EUP activations over the whole (1, 4H) gates row
        # instead of four lane-sparse per-gate activations.
        # PyTorch gate order i, f, g, o (gate g occupies lanes [g*H, (g+1)*H)).
        sig = jax.nn.sigmoid(gates)
        tnh = jnp.tanh(gates)
        i_g = sig[:, 0 * H:1 * H]
        f_g = sig[:, 1 * H:2 * H]
        g_g = tnh[:, 2 * H:3 * H]
        o_g = sig[:, 3 * H:4 * H]
        c = f_g * c + i_g * g_g
        h = o_g * jnp.tanh(c)
        # Static-index full-row store, off the h->h critical chain.  Every row
        # is written, so no separate zero-init pass is needed.
        h_all_ref[pl.ds(t, 1), :] = h

    # ---- hidden2tag + log_softmax over the lane-dense padded tag axis ------
    # w_out is zero-padded to TAGP=128 columns and b_out carries -1e30 in the
    # padded lanes, so padded lanes vanish under log_softmax and the output
    # store is an unmasked lane-dense (T, 128) vst (wrapper slices [:, :tagset]).
    tag_space = (
        jnp.dot(h_all_ref[...].astype(w_out_ref.dtype), w_out_ref[...],
                preferred_element_type=jnp.float32)
        + b_out_ref[...]
    )
    m = jnp.max(tag_space, axis=-1, keepdims=True)
    lse = jnp.log(jnp.sum(jnp.exp(tag_space - m), axis=-1, keepdims=True)) + m
    out_ref[...] = tag_space - lse


def prepare_params(params):
    """One-time weight repacking, hoisted out of the per-call forward."""
    E = params["w_ih"].shape[1]
    H = params["w_hh"].shape[-1]
    tagset = params["w_out"].shape[-1]
    TAGP = ((tagset + 127) // 128) * 128   # lane-dense padded tag width

    # Gate-fused weights: gate g occupies output lanes [g*H, (g+1)*H).
    w_ih_cat = jnp.transpose(params["w_ih"], (1, 0, 2)).reshape(E, 4 * H)
    w_hh_cat = jnp.transpose(params["w_hh"], (1, 0, 2)).reshape(H, 4 * H)
    b_cat = jnp.transpose(params["b"], (1, 0, 2)).reshape(1, 4 * H)

    # hidden2tag padded lane-dense: zero columns beyond tagset, -1e30 in the
    # padded bias lanes so they contribute exp(-inf)=0 to the softmax.
    w_out_pad = jnp.zeros((H, TAGP), jnp.float32).at[:, :tagset].set(params["w_out"])
    b_out_pad = jnp.full((1, TAGP), -1e30, jnp.float32).at[:, :tagset].set(params["b_out"])

    return {
        # bf16 table -> gather already emits bf16 MXU operands (halves HBM traffic).
        "embedding": params["embedding"].astype(jnp.bfloat16),
        "w_ih_cat": w_ih_cat.astype(jnp.bfloat16),
        "w_hh_cat": w_hh_cat.astype(jnp.float32),   # recurrence stays f32
        "b_cat": b_cat.astype(jnp.float32),
        "w_out_pad": w_out_pad.astype(jnp.bfloat16),
        "b_out_pad": b_out_pad,
    }


@functools.partial(jax.jit, static_argnums=(2,))
def lstm_split_forward(sentence, prepared, tagset):
    # Embedding gather: plain-JAX glue (dynamic token-id gather).
    # TODO(synk): fuse the gather into the kernel via PrefetchScalarGridSpec +
    # pl.Element row gather to drop the (T, E) HBM round trip at production T.
    emb = jnp.take(prepared["embedding"], sentence, axis=0)     # (T, E) bf16
    T, _ = emb.shape
    H = prepared["w_hh_cat"].shape[0]
    TAGP = prepared["w_out_pad"].shape[1]

    vmem = pl.BlockSpec(memory_space=pltpu.MemorySpace.VMEM)
    out_pad = pl.pallas_call(
        lstm_split_kernel,
        out_shape=jax.ShapeDtypeStruct((T, TAGP), jnp.float32),
        in_specs=[vmem] * 6,
        out_specs=vmem,
        scratch_shapes=[pltpu.VMEM((T, H), jnp.float32)],   # per-step hidden states
    )(emb, prepared["w_ih_cat"], prepared["w_hh_cat"], prepared["b_cat"],
      prepared["w_out_pad"], prepared["b_out_pad"])
    return out_pad[:, :tagset]


def ref_forward(sentence, params):
    """Pure-JAX f32 reference (PyTorch LSTM semantics, gate order i, f, g, o)."""
    emb = jnp.take(params["embedding"], sentence, axis=0).astype(jnp.float32)
    w_ih, w_hh, b = params["w_ih"], params["w_hh"], params["b"]
    H = w_hh.shape[-1]

    def step(carry, x):
        h, c = carry
        i = jax.nn.sigmoid(x @ w_ih[0] + h @ w_hh[0] + b[0, 0])
        f = jax.nn.sigmoid(x @ w_ih[1] + h @ w_hh[1] + b[1, 0])
        g = jnp.tanh(x @ w_ih[2] + h @ w_hh[2] + b[2, 0])
        o = jax.nn.sigmoid(x @ w_ih[3] + h @ w_hh[3] + b[3, 0])
        c = f * c + i * g
        h = o * jnp.tanh(c)
        return (h, c), h

    (_, _), hs = lax.scan(step, (jnp.zeros(H), jnp.zeros(H)), emb)
    tag_space = hs @ params["w_out"] + params["b_out"][0]
    return jax.nn.log_softmax(tag_space, axis=1)


def make_params(key, vocab_size, embedding_dim, hidden_dim, tagset_size):
    ks = jax.random.split(key, 7)
    scale = 0.1
    return {
        "embedding": scale * jax.random.normal(ks[0], (vocab_size, embedding_dim), jnp.float32),
        "w_ih": scale * jax.random.normal(ks[1], (4, embedding_dim, hidden_dim), jnp.float32),
        "w_hh": scale * jax.random.normal(ks[2], (4, hidden_dim, hidden_dim), jnp.float32),
        # b = b_ih + b_hh (combined), kept per-gate.
        "b": scale * jax.random.normal(ks[3], (4, 1, hidden_dim), jnp.float32),
        "w_out": scale * jax.random.normal(ks[4], (hidden_dim, tagset_size), jnp.float32),
        "b_out": scale * jax.random.normal(ks[5], (1, tagset_size), jnp.float32),
    }


if __name__ == "__main__":
    vocab_size, embedding_dim, hidden_dim, tagset_size = 50, 32, 32, 8
    seq_len = 8

    key = jax.random.PRNGKey(0)
    k_param, k_sent = jax.random.split(key)
    params = make_params(k_param, vocab_size, embedding_dim, hidden_dim, tagset_size)
    sentence = jax.random.randint(k_sent, (seq_len,), 0, vocab_size, dtype=jnp.int32)

    # One-time parameter preparation (hoisted repacking / padding / bf16 cast).
    prepared = prepare_params(params)

    out = jax.block_until_ready(lstm_split_forward(sentence, prepared, tagset_size))
    ref = jax.block_until_ready(ref_forward(sentence, params))

    assert out.shape == (seq_len, tagset_size)
    # bf16 MXU operands on the projection / epilogue -> relaxed tolerance vs f32 ref.
    max_err = jnp.max(jnp.abs(out - ref))
    assert jnp.allclose(out, ref, atol=1e-2, rtol=1e-2), (
        f"mismatch: max abs err = {max_err}"
    )
    print("KERNEL_OK")
</pallas_src>

<mosaic_0001>
module attributes {stable_mosaic.version = 11 : i64} {
  func.func @lstm_split_kernel(%arg0: memref<8x32xbf16, #tpu.memory_space<vmem>>, %arg1: memref<32x128xbf16, #tpu.memory_space<vmem>>, %arg2: memref<32x128xf32, #tpu.memory_space<vmem>>, %arg3: memref<1x128xf32, #tpu.memory_space<vmem>>, %arg4: memref<32x128xbf16, #tpu.memory_space<vmem>>, %arg5: memref<1x128xf32, #tpu.memory_space<vmem>>, %arg6: memref<8x128xf32, #tpu.memory_space<vmem>>, %arg7: memref<8x32xf32, #tpu.memory_space<vmem>>) attributes {dimension_semantics = [], scalar_prefetch = 0 : i64, scratch_operands = 1 : i64, tpu.core_type = #tpu.core_type<tc>} {
    %c0 = arith.constant 0 : index
    %c0_0 = arith.constant 0 : index
    %0 = vector.load %arg0[%c0, %c0_0] : memref<8x32xbf16, #tpu.memory_space<vmem>>, vector<8x32xbf16>
    %c0_1 = arith.constant 0 : index
    %c0_2 = arith.constant 0 : index
    %1 = vector.load %arg1[%c0_1, %c0_2] : memref<32x128xbf16, #tpu.memory_space<vmem>>, vector<32x128xbf16>
    %cst = arith.constant dense<0.000000e+00> : vector<8x128xf32>
    %2 = tpu.matmul %0, %1, %cst {dimension_numbers = #tpu.dot_dimension_numbers<[1], [0], [0], [1], [0, 0, 1, 1], [], []>} : vector<8x32xbf16>, vector<32x128xbf16>, vector<8x128xf32> -> vector<8x128xf32>
    %c0_3 = arith.constant 0 : index
    %c0_4 = arith.constant 0 : index
    %3 = vector.load %arg3[%c0_3, %c0_4] : memref<1x128xf32, #tpu.memory_space<vmem>>, vector<1x128xf32>
    %4 = vector.broadcast %3 : vector<1x128xf32> to vector<8x128xf32>
    %5 = arith.addf %2, %4 : vector<8x128xf32>
    %c0_5 = arith.constant 0 : index
    %c0_6 = arith.constant 0 : index
    %6 = vector.load %arg2[%c0_5, %c0_6] : memref<32x128xf32, #tpu.memory_space<vmem>>, vector<32x128xf32>
    %cst_7 = arith.constant 0.000000e+00 : f32
    %7 = vector.broadcast %cst_7 : f32 to vector<1x32xf32>
    %cst_8 = arith.constant 0.000000e+00 : f32
    %8 = vector.broadcast %cst_8 : f32 to vector<1x32xf32>
    %9 = vector.extract_strided_slice %5 {offsets = [0, 0], sizes = [1, 128], strides = [1, 1]} : vector<8x128xf32> to vector<1x128xf32>
    %cst_9 = arith.constant dense<0.000000e+00> : vector<1x128xf32>
    %10 = tpu.matmul %7, %6, %cst_9 {dimension_numbers = #tpu.dot_dimension_numbers<[1], [0], [0], [1], [0, 0, 1, 1], [], []>} : vector<1x32xf32>, vector<32x128xf32>, vector<1x128xf32> -> vector<1x128xf32>
    %11 = arith.addf %9, %10 : vector<1x128xf32>
    %12 = arith.negf %11 : vector<1x128xf32>
    %13 = math.exp %12 : vector<1x128xf32>
    %cst_10 = arith.constant 1.000000e+00 : f32
    %14 = vector.broadcast %cst_10 : f32 to vector<1x128xf32>
    %15 = arith.addf %14, %13 : vector<1x128xf32>
    %16 = arith.divf %14, %15 : vector<1x128xf32>
    %17 = math.tanh %11 : vector<1x128xf32>
    %18 = vector.extract_strided_slice %16 {offsets = [0, 0], sizes = [1, 32], strides = [1, 1]} : vector<1x128xf32> to vector<1x32xf32>
    %19 = vector.extract_strided_slice %16 {offsets = [0, 32], sizes = [1, 32], strides = [1, 1]} : vector<1x128xf32> to vector<1x32xf32>
    %20 = vector.extract_strided_slice %17 {offsets = [0, 64], sizes = [1, 32], strides = [1, 1]} : vector<1x128xf32> to vector<1x32xf32>
    %21 = vector.extract_strided_slice %16 {offsets = [0, 96], sizes = [1, 32], strides = [1, 1]} : vector<1x128xf32> to vector<1x32xf32>
    %22 = arith.mulf %19, %8 : vector<1x32xf32>
    %23 = arith.mulf %18, %20 : vector<1x32xf32>
    %24 = arith.addf %22, %23 : vector<1x32xf32>
    %25 = math.tanh %24 : vector<1x32xf32>
    %26 = arith.mulf %21, %25 : vector<1x32xf32>
    %c0_11 = arith.constant 0 : index
    %c0_12 = arith.constant 0 : index
    %27 = vector.load %arg7[%c0_11, %c0_12] : memref<8x32xf32, #tpu.memory_space<vmem>>, vector<1x32xf32>
    tpu.vector_store %arg7[%c0_11, %c0_12], %26 {strides = array<i32>} : memref<8x32xf32, #tpu.memory_space<vmem>>, vector<1x32xf32>,
    %28 = vector.extract_strided_slice %5 {offsets = [1, 0], sizes = [1, 128], strides = [1, 1]} : vector<8x128xf32> to vector<1x128xf32>
    %cst_13 = arith.constant dense<0.000000e+00> : vector<1x128xf32>
    %29 = tpu.matmul %26, %6, %cst_13 {dimension_numbers = #tpu.dot_dimension_numbers<[1], [0], [0], [1], [0, 0, 1, 1], [], []>} : vector<1x32xf32>, vector<32x128xf32>, vector<1x128xf32> -> vector<1x128xf32>
    %30 = arith.addf %28, %29 : vector<1x128xf32>
    %31 = arith.negf %30 : vector<1x128xf32>
    %32 = math.exp %31 : vector<1x128xf32>
    %cst_14 = arith.constant 1.000000e+00 : f32
    %33 = vector.broadcast %cst_14 : f32 to vector<1x128xf32>
    %34 = arith.addf %33, %32 : vector<1x128xf32>
    %35 = arith.divf %33, %34 : vector<1x128xf32>
    %36 = math.tanh %30 : vector<1x128xf32>
    %37 = vector.extract_strided_slice %35 {offsets = [0, 0], sizes = [1, 32], strides = [1, 1]} : vector<1x128xf32> to vector<1x32xf32>
    %38 = vector.extract_strided_slice %35 {offsets = [0, 32], sizes = [1, 32], strides = [1, 1]} : vector<1x128xf32> to vector<1x32xf32>
    %39 = vector.extract_strided_slice %36 {offsets = [0, 64], sizes = [1, 32], strides = [1, 1]} : vector<1x128xf32> to vector<1x32xf32>
    %40 = vector.extract_strided_slice %35 {offsets = [0, 96], sizes = [1, 32], strides = [1, 1]} : vector<1x128xf32> to vector<1x32xf32>
    %41 = arith.mulf %38, %24 : vector<1x32xf32>
    %42 = arith.mulf %37, %39 : vector<1x32xf32>
    %43 = arith.addf %41, %42 : vector<1x32xf32>
    %44 = math.tanh %43 : vector<1x32xf32>
    %45 = arith.mulf %40, %44 : vector<1x32xf32>
    %c1 = arith.constant 1 : index
    %c0_15 = arith.constant 0 : index
    %46 = vector.load %arg7[%c1, %c0_15] : memref<8x32xf32, #tpu.memory_space<vmem>>, vector<1x32xf32>
    tpu.vector_store %arg7[%c1, %c0_15], %45 {strides = array<i32>} : memref<8x32xf32, #tpu.memory_space<vmem>>, vector<1x32xf32>,
    %47 = vector.extract_strided_slice %5 {offsets = [2, 0], sizes = [1, 128], strides = [1, 1]} : vector<8x128xf32> to vector<1x128xf32>
    %cst_16 = arith.constant dense<0.000000e+00> : vector<1x128xf32>
    %48 = tpu.matmul %45, %6, %cst_16 {dimension_numbers = #tpu.dot_dimension_numbers<[1], [0], [0], [1], [0, 0, 1, 1], [], []>} : vector<1x32xf32>, vector<32x128xf32>, vector<1x128xf32> -> vector<1x128xf32>
    %49 = arith.addf %47, %48 : vector<1x128xf32>
    %50 = arith.negf %49 : vector<1x128xf32>
    %51 = math.exp %50 : vector<1x128xf32>
    %cst_17 = arith.constant 1.000000e+00 : f32
    %52 = vector.broadcast %cst_17 : f32 to vector<1x128xf32>
    %53 = arith.addf %52, %51 : vector<1x128xf32>
    %54 = arith.divf %52, %53 : vector<1x128xf32>
    %55 = math.tanh %49 : vector<1x128xf32>
    %56 = vector.extract_strided_slice %54 {offsets = [0, 0], sizes = [1, 32], strides = [1, 1]} : vector<1x128xf32> to vector<1x32xf32>
    %57 = vector.extract_strided_slice %54 {offsets = [0, 32], sizes = [1, 32], strides = [1, 1]} : vector<1x128xf32> to vector<1x32xf32>
    %58 = vector.extract_strided_slice %55 {offsets = [0, 64], sizes = [1, 32], strides = [1, 1]} : vector<1x128xf32> to vector<1x32xf32>
    %59 = vector.extract_strided_slice %54 {offsets = [0, 96], sizes = [1, 32], strides = [1, 1]} : vector<1x128xf32> to vector<1x32xf32>
    %60 = arith.mulf %57, %43 : vector<1x32xf32>
    %61 = arith.mulf %56, %58 : vector<1x32xf32>
    %62 = arith.addf %60, %61 : vector<1x32xf32>
    %63 = math.tanh %62 : vector<1x32xf32>
    %64 = arith.mulf %59, %63 : vector<1x32xf32>
    %c2 = arith.constant 2 : index
    %c0_18 = arith.constant 0 : index
    %65 = vector.load %arg7[%c2, %c0_18] : memref<8x32xf32, #tpu.memory_space<vmem>>, vector<1x32xf32>
    tpu.vector_store %arg7[%c2, %c0_18], %64 {strides = array<i32>} : memref<8x32xf32, #tpu.memory_space<vmem>>, vector<1x32xf32>,
    %66 = vector.extract_strided_slice %5 {offsets = [3, 0], sizes = [1, 128], strides = [1, 1]} : vector<8x128xf32> to vector<1x128xf32>
    %cst_19 = arith.constant dense<0.000000e+00> : vector<1x128xf32>
    %67 = tpu.matmul %64, %6, %cst_19 {dimension_numbers = #tpu.dot_dimension_numbers<[1], [0], [0], [1], [0, 0, 1, 1], [], []>} : vector<1x32xf32>, vector<32x128xf32>, vector<1x128xf32> -> vector<1x128xf32>
    %68 = arith.addf %66, %67 : vector<1x128xf32>
    %69 = arith.negf %68 : vector<1x128xf32>
    %70 = math.exp %69 : vector<1x128xf32>
    %cst_20 = arith.constant 1.000000e+00 : f32
    %71 = vector.broadcast %cst_20 : f32 to vector<1x128xf32>
    %72 = arith.addf %71, %70 : vector<1x128xf32>
    %73 = arith.divf %71, %72 : vector<1x128xf32>
    %74 = math.tanh %68 : vector<1x128xf32>
    %75 = vector.extract_strided_slice %73 {offsets = [0, 0], sizes = [1, 32], strides = [1, 1]} : vector<1x128xf32> to vector<1x32xf32>
    %76 = vector.extract_strided_slice %73 {offsets = [0, 32], sizes = [1, 32], strides = [1, 1]} : vector<1x128xf32> to vector<1x32xf32>
    %77 = vector.extract_strided_slice %74 {offsets = [0, 64], sizes = [1, 32], strides = [1, 1]} : vector<1x128xf32> to vector<1x32xf32>
    %78 = vector.extract_strided_slice %73 {offsets = [0, 96], sizes = [1, 32], strides = [1, 1]} : vector<1x128xf32> to vector<1x32xf32>
    %79 = arith.mulf %76, %62 : vector<1x32xf32>
    %80 = arith.mulf %75, %77 : vector<1x32xf32>
    %81 = arith.addf %79, %80 : vector<1x32xf32>
    %82 = math.tanh %81 : vector<1x32xf32>
    %83 = arith.mulf %78, %82 : vector<1x32xf32>
    %c3 = arith.constant 3 : index
    %c0_21 = arith.constant 0 : index
    %84 = vector.load %arg7[%c3, %c0_21] : memref<8x32xf32, #tpu.memory_space<vmem>>, vector<1x32xf32>
    tpu.vector_store %arg7[%c3, %c0_21], %83 {strides = array<i32>} : memref<8x32xf32, #tpu.memory_space<vmem>>, vector<1x32xf32>,
    %85 = vector.extract_strided_slice %5 {offsets = [4, 0], sizes = [1, 128], strides = [1, 1]} : vector<8x128xf32> to vector<1x128xf32>
    %cst_22 = arith.constant dense<0.000000e+00> : vector<1x128xf32>
    %86 = tpu.matmul %83, %6, %cst_22 {dimension_numbers = #tpu.dot_dimension_numbers<[1], [0], [0], [1], [0, 0, 1, 1], [], []>} : vector<1x32xf32>, vector<32x128xf32>, vector<1x128xf32> -> vector<1x128xf32>
    %87 = arith.addf %85, %86 : vector<1x128xf32>
    %88 = arith.negf %87 : vector<1x128xf32>
    %89 = math.exp %88 : vector<1x128xf32>
    %cst_23 = arith.constant 1.000000e+00 : f32
    %90 = vector.broadcast %cst_23 : f32 to vector<1x128xf32>
    %91 = arith.addf %90, %89 : vector<1x128xf32>
    %92 = arith.divf %90, %91 : vector<1x128xf32>
    %93 = math.tanh %87 : vector<1x128xf32>
    %94 = vector.extract_strided_slice %92 {offsets = [0, 0], sizes = [1, 32], strides = [1, 1]} : vector<1x128xf32> to vector<1x32xf32>
    %95 = vector.extract_strided_slice %92 {offsets = [0, 32], sizes = [1, 32], strides = [1, 1]} : vector<1x128xf32> to vector<1x32xf32>
    %96 = vector.extract_strided_slice %93 {offsets = [0, 64], sizes = [1, 32], strides = [1, 1]} : vector<1x128xf32> to vector<1x32xf32>
    %97 = vector.extract_strided_slice %92 {offsets = [0, 96], sizes = [1, 32], strides = [1, 1]} : vector<1x128xf32> to vector<1x32xf32>
    %98 = arith.mulf %95, %81 : vector<1x32xf32>
    %99 = arith.mulf %94, %96 : vector<1x32xf32>
    %100 = arith.addf %98, %99 : vector<1x32xf32>
    %101 = math.tanh %100 : vector<1x32xf32>
    %102 = arith.mulf %97, %101 : vector<1x32xf32>
    %c4 = arith.constant 4 : index
    %c0_24 = arith.constant 0 : index
    %103 = vector.load %arg7[%c4, %c0_24] : memref<8x32xf32, #tpu.memory_space<vmem>>, vector<1x32xf32>
    tpu.vector_store %arg7[%c4, %c0_24], %102 {strides = array<i32>} : memref<8x32xf32, #tpu.memory_space<vmem>>, vector<1x32xf32>,
    %104 = vector.extract_strided_slice %5 {offsets = [5, 0], sizes = [1, 128], strides = [1, 1]} : vector<8x128xf32> to vector<1x128xf32>
    %cst_25 = arith.constant dense<0.000000e+00> : vector<1x128xf32>
    %105 = tpu.matmul %102, %6, %cst_25 {dimension_numbers = #tpu.dot_dimension_numbers<[1], [0], [0], [1], [0, 0, 1, 1], [], []>} : vector<1x32xf32>, vector<32x128xf32>, vector<1x128xf32> -> vector<1x128xf32>
    %106 = arith.addf %104, %105 : vector<1x128xf32>
    %107 = arith.negf %106 : vector<1x128xf32>
    %108 = math.exp %107 : vector<1x128xf32>
    %cst_26 = arith.constant 1.000000e+00 : f32
    %109 = vector.broadcast %cst_26 : f32 to vector<1x128xf32>
    %110 = arith.addf %109, %108 : vector<1x128xf32>
    %111 = arith.divf %109, %110 : vector<1x128xf32>
    %112 = math.tanh %106 : vector<1x128xf32>
    %113 = vector.extract_strided_slice %111 {offsets = [0, 0], sizes = [1, 32], strides = [1, 1]} : vector<1x128xf32> to vector<1x32xf32>
    %114 = vector.extract_strided_slice %111 {offsets = [0, 32], sizes = [1, 32], strides = [1, 1]} : vector<1x128xf32> to vector<1x32xf32>
    %115 = vector.extract_strided_slice %112 {offsets = [0, 64], sizes = [1, 32], strides = [1, 1]} : vector<1x128xf32> to vector<1x32xf32>
    %116 = vector.extract_strided_slice %111 {offsets = [0, 96], sizes = [1, 32], strides = [1, 1]} : vector<1x128xf32> to vector<1x32xf32>
    %117 = arith.mulf %114, %100 : vector<1x32xf32>
    %118 = arith.mulf %113, %115 : vector<1x32xf32>
    %119 = arith.addf %117, %118 : vector<1x32xf32>
    %120 = math.tanh %119 : vector<1x32xf32>
    %121 = arith.mulf %116, %120 : vector<1x32xf32>
    %c5 = arith.constant 5 : index
    %c0_27 = arith.constant 0 : index
    %122 = vector.load %arg7[%c5, %c0_27] : memref<8x32xf32, #tpu.memory_space<vmem>>, vector<1x32xf32>
    tpu.vector_store %arg7[%c5, %c0_27], %121 {strides = array<i32>} : memref<8x32xf32, #tpu.memory_space<vmem>>, vector<1x32xf32>,
    %123 = vector.extract_strided_slice %5 {offsets = [6, 0], sizes = [1, 128], strides = [1, 1]} : vector<8x128xf32> to vector<1x128xf32>
    %cst_28 = arith.constant dense<0.000000e+00> : vector<1x128xf32>
    %124 = tpu.matmul %121, %6, %cst_28 {dimension_numbers = #tpu.dot_dimension_numbers<[1], [0], [0], [1], [0, 0, 1, 1], [], []>} : vector<1x32xf32>, vector<32x128xf32>, vector<1x128xf32> -> vector<1x128xf32>
    %125 = arith.addf %123, %124 : vector<1x128xf32>
    %126 = arith.negf %125 : vector<1x128xf32>
    %127 = math.exp %126 : vector<1x128xf32>
    %cst_29 = arith.constant 1.000000e+00 : f32
    %128 = vector.broadcast %cst_29 : f32 to vector<1x128xf32>
    %129 = arith.addf %128, %127 : vector<1x128xf32>
    %130 = arith.divf %128, %129 : vector<1x128xf32>
    %131 = math.tanh %125 : vector<1x128xf32>
    %132 = vector.extract_strided_slice %130 {offsets = [0, 0], sizes = [1, 32], strides = [1, 1]} : vector<1x128xf32> to vector<1x32xf32>
    %133 = vector.extract_strided_slice %130 {offsets = [0, 32], sizes = [1, 32], strides = [1, 1]} : vector<1x128xf32> to vector<1x32xf32>
    %134 = vector.extract_strided_slice %131 {offsets = [0, 64], sizes = [1, 32], strides = [1, 1]} : vector<1x128xf32> to vector<1x32xf32>
    %135 = vector.extract_strided_slice %130 {offsets = [0, 96], sizes = [1, 32], strides = [1, 1]} : vector<1x128xf32> to vector<1x32xf32>
    %136 = arith.mulf %133, %119 : vector<1x32xf32>
    %137 = arith.mulf %132, %134 : vector<1x32xf32>
    %138 = arith.addf %136, %137 : vector<1x32xf32>
    %139 = math.tanh %138 : vector<1x32xf32>
    %140 = arith.mulf %135, %139 : vector<1x32xf32>
    %c6 = arith.constant 6 : index
    %c0_30 = arith.constant 0 : index
    %141 = vector.load %arg7[%c6, %c0_30] : memref<8x32xf32, #tpu.memory_space<vmem>>, vector<1x32xf32>
    tpu.vector_store %arg7[%c6, %c0_30], %140 {strides = array<i32>} : memref<8x32xf32, #tpu.memory_space<vmem>>, vector<1x32xf32>,
    %142 = vector.extract_strided_slice %5 {offsets = [7, 0], sizes = [1, 128], strides = [1, 1]} : vector<8x128xf32> to vector<1x128xf32>
    %cst_31 = arith.constant dense<0.000000e+00> : vector<1x128xf32>
    %143 = tpu.matmul %140, %6, %cst_31 {dimension_numbers = #tpu.dot_dimension_numbers<[1], [0], [0], [1], [0, 0, 1, 1], [], []>} : vector<1x32xf32>, vector<32x128xf32>, vector<1x128xf32> -> vector<1x128xf32>
    %144 = arith.addf %142, %143 : vector<1x128xf32>
    %145 = arith.negf %144 : vector<1x128xf32>
    %146 = math.exp %145 : vector<1x128xf32>
    %cst_32 = arith.constant 1.000000e+00 : f32
    %147 = vector.broadcast %cst_32 : f32 to vector<1x128xf32>
    %148 = arith.addf %147, %146 : vector<1x128xf32>
    %149 = arith.divf %147, %148 : vector<1x128xf32>
    %150 = math.tanh %144 : vector<1x128xf32>
    %151 = vector.extract_strided_slice %149 {offsets = [0, 0], sizes = [1, 32], strides = [1, 1]} : vector<1x128xf32> to vector<1x32xf32>
    %152 = vector.extract_strided_slice %149 {offsets = [0, 32], sizes = [1, 32], strides = [1, 1]} : vector<1x128xf32> to vector<1x32xf32>
    %153 = vector.extract_strided_slice %150 {offsets = [0, 64], sizes = [1, 32], strides = [1, 1]} : vector<1x128xf32> to vector<1x32xf32>
    %154 = vector.extract_strided_slice %149 {offsets = [0, 96], sizes = [1, 32], strides = [1, 1]} : vector<1x128xf32> to vector<1x32xf32>
    %155 = arith.mulf %152, %138 : vector<1x32xf32>
    %156 = arith.mulf %151, %153 : vector<1x32xf32>
    %157 = arith.addf %155, %156 : vector<1x32xf32>
    %158 = math.tanh %157 : vector<1x32xf32>
    %159 = arith.mulf %154, %158 : vector<1x32xf32>
    %c7 = arith.constant 7 : index
    %c0_33 = arith.constant 0 : index
    %160 = vector.load %arg7[%c7, %c0_33] : memref<8x32xf32, #tpu.memory_space<vmem>>, vector<1x32xf32>
    tpu.vector_store %arg7[%c7, %c0_33], %159 {strides = array<i32>} : memref<8x32xf32, #tpu.memory_space<vmem>>, vector<1x32xf32>,
    %c0_34 = arith.constant 0 : index
    %c0_35 = arith.constant 0 : index
    %161 = vector.load %arg7[%c0_34, %c0_35] : memref<8x32xf32, #tpu.memory_space<vmem>>, vector<8x32xf32>
    %162 = arith.truncf %161 : vector<8x32xf32> to vector<8x32xbf16>
    %c0_36 = arith.constant 0 : index
    %c0_37 = arith.constant 0 : index
    %163 = vector.load %arg4[%c0_36, %c0_37] : memref<32x128xbf16, #tpu.memory_space<vmem>>, vector<32x128xbf16>
    %cst_38 = arith.constant dense<0.000000e+00> : vector<8x128xf32>
    %164 = tpu.matmul %162, %163, %cst_38 {dimension_numbers = #tpu.dot_dimension_numbers<[1], [0], [0], [1], [0, 0, 1, 1], [], []>} : vector<8x32xbf16>, vector<32x128xbf16>, vector<8x128xf32> -> vector<8x128xf32>
    %c0_39 = arith.constant 0 : index
    %c0_40 = arith.constant 0 : index
    %165 = vector.load %arg5[%c0_39, %c0_40] : memref<1x128xf32, #tpu.memory_space<vmem>>, vector<1x128xf32>
    %166 = vector.broadcast %165 : vector<1x128xf32> to vector<8x128xf32>
    %167 = arith.addf %164, %166 : vector<8x128xf32>
    %cst_41 = arith.constant dense<0xFF800000> : vector<8xf32>
    %168 = vector.multi_reduction <maximumf>, %167, %cst_41 [1] : vector<8x128xf32> to vector<8xf32>
    %169 = vector.shape_cast %168 : vector<8xf32> to vector<8x1xf32>
    %170 = vector.broadcast %169 : vector<8x1xf32> to vector<8x128xf32>
    %171 = arith.subf %167, %170 : vector<8x128xf32>
    %172 = math.exp %171 : vector<8x128xf32>
    %cst_42 = arith.constant dense<0.000000e+00> : vector<8xf32>
    %173 = vector.multi_reduction <add>, %172, %cst_42 [1] : vector<8x128xf32> to vector<8xf32>
    %174 = vector.shape_cast %173 : vector<8xf32> to vector<8x1xf32>
    %175 = math.log %174 : vector<8x1xf32>
    %176 = arith.addf %175, %169 : vector<8x1xf32>
    %177 = vector.broadcast %176 : vector<8x1xf32> to vector<8x128xf32>
    %178 = arith.subf %167, %177 : vector<8x128xf32>
    %c0_43 = arith.constant 0 : index
    %c0_44 = arith.constant 0 : index
    %179 = vector.load %arg6[%c0_43, %c0_44] : memref<8x128xf32, #tpu.memory_space<vmem>>, vector<8x128xf32>
    tpu.vector_store %arg6[%c0_43, %c0_44], %178 {strides = array<i32>} : memref<8x128xf32, #tpu.memory_space<vmem>>, vector<8x128xf32>,
    return
  }
}

</mosaic_0001>

<llo_original>
// kernel: lstm_split_forward.1
$region0: #{lstm_split_forward.1}
  #allocation0 [shape = 'u32[]', space=smem, size = 0x4, offset = 0x4, fixed_abs, tag = 'smem constant byte address 0x4 - core index']
  #allocation1 [shape = 'u32[72,128]{1,0:T(1,128)}', space=vmem, size = 0x9000, scoped, tag = 'internal scratch']
  #allocation2 [shape = 'f32[8,32]{1,0:T(8,128)}', space=vmem, size = 0x1000, scoped, tag = 'scratch operand']
  %s0 = inlined_call_operand.vmem [shape: bf16[8,32], index: 0, kind: input, shape index: {}]
  %s1 = inlined_call_operand.vmem [shape: bf16[32,128], index: 1, kind: input, shape index: {}]
  %s2 = inlined_call_operand.vmem [shape: f32[32,128], index: 2, kind: input, shape index: {}]
  %s3 = inlined_call_operand.vmem [shape: f32[1,128], index: 3, kind: input, shape index: {}]
  %s4 = inlined_call_operand.vmem [shape: bf16[32,128], index: 4, kind: input, shape index: {}]
  %s5 = inlined_call_operand.vmem [shape: f32[1,128], index: 5, kind: input, shape index: {}]
  %s6 = inlined_call_operand.hbm [shape: f32[8,128], index: 6, kind: output, shape index: {}]
  %s7 = sld [smem:[#allocation0]]
  $region34: #{lstm_split_forward.1} parent=0
    _
  %s9 = ssub.s32 1, %s7
  %s10 = scalar_select 0, %s9, %s7
  $region1: #{lstm_split_forward.1} parent=0
    #allocation3 [shape = 'u8[4096]{0}', space=vmem, size = 0x1000, scoped, tag = 'output window, operand 0, single buffered']
    #allocation4 [shape = 's32[1]{0}', space=sflag, size = 0x4, scoped, tag = 'scoped memory for lstm_split_forward.1']
    %11 = vsyncpa [#allocation4], 0
    // Predicated region
    $region2: #{lstm_split_forward.1} parent=1 // pred_check
      _
    $region3: #{lstm_split_forward.1} parent=1 // pred_check_branch
      %13 = sbr.rel (0) target = $region5
    $region4: #{lstm_split_forward.1} parent=1 // pred_region
      _
    $region5: #{lstm_split_forward.1} parent=1 // pred_fallthru
      _
    // Predicated region
    $region6: #{lstm_split_forward.1} parent=1 // pred_check
      _
    $region7: #{lstm_split_forward.1} parent=1 // pred_check_branch
      %15 = sbr.rel (0) target = $region9
    $region8: #{lstm_split_forward.1} parent=1 // pred_region
      _
    $region9: #{lstm_split_forward.1} parent=1 // pred_fallthru
      _
    // Predicated region
    $region10: #{lstm_split_forward.1} parent=1 // pred_check
      _
    $region11: #{lstm_split_forward.1} parent=1 // pred_check_branch
      %17 = sbr.rel (0) target = $region13
    $region12: #{lstm_split_forward.1} parent=1 // pred_region
      _
    $region13: #{lstm_split_forward.1} parent=1 // pred_fallthru
      _
    // Predicated region
    $region14: #{lstm_split_forward.1} parent=1 // pred_check
      _
    $region15: #{lstm_split_forward.1} parent=1 // pred_check_branch
      %19 = sbr.rel (0) target = $region17
    $region16: #{lstm_split_forward.1} parent=1 // pred_region
      _
    $region17: #{lstm_split_forward.1} parent=1 // pred_fallthru
      _
    // Predicated region
    $region18: #{lstm_split_forward.1} parent=1 // pred_check
      _
    $region19: #{lstm_split_forward.1} parent=1 // pred_check_branch
      %21 = sbr.rel (0) target = $region21
    $region20: #{lstm_split_forward.1} parent=1 // pred_region
      _
    $region21: #{lstm_split_forward.1} parent=1 // pred_fallthru
      _
    // Predicated region
    $region22: #{lstm_split_forward.1} parent=1 // pred_check
      _
    $region23: #{lstm_split_forward.1} parent=1 // pred_check_branch
      %23 = sbr.rel (0) target = $region25
    $region24: #{lstm_split_forward.1} parent=1 // pred_region
      _
    $region25: #{lstm_split_forward.1} parent=1 // pred_fallthru
      _
    %v25 = vld [vmem:[%s0] sm:$0xf]
    %v26 = vld [vmem:[%s1] sm:$0xf]
    %v27 = vld [vmem:[%s1 + $0x4] sm:$0xf]
    %v28 = vld [vmem:[%s1 + $0x8] sm:$0xf]
    %v29 = vld [vmem:[%s1 + $0xc] sm:$0xf]
    %v30 = vld [vmem:[%s3] sm:$0x1]
    %v32 = vperm.slane %v30, 0
    %v38 = vunpack.c.l.b16 %v26
    %v39 = vunpack.c.l.b16 %v27
    %v40 = vunpack.c.l.b16 %v28
    %v41 = vunpack.c.l.b16 %v29
    %v42 = vpack.c.b16 %v39, %v38
    %v43 = vpack.c.b16 %v41, %v40
    %vm46 = vcmask 261120
    %v48 = vsel %vm46, %v25, 0
    %50 = vmatpush.bf16.msra.mxu0 0
    %51 = vmatpush.bf16.msra.mxu0 0
    %52 = vmatpush.bf16.msra.mxu0 0
    %53 = vmatpush.bf16.msra.mxu0 0
    %54 = vmatpush.bf16.msra.mxu0 0
    %55 = vmatpush.bf16.msra.mxu0 0
    %56 = vmatpush.bf16.msra.mxu0 %v43
    %57 = vmatpush.bf16.msra.mxu0 %v42
    %58 = vmatmul.bf16.gmra.mxu0 %v48
    %v59 = vpop.f32.mrf.mxu0
    %v60 = vadd.f32 %v32, %v59
    %v61 = vpop.f32.mrf.mxu0
    %62 = vdwg.mxu0
    %v63 = vld [vmem:[%s2] sm:$0xff]
    %v64 = vld [vmem:[%s2 + $0x8] sm:$0xff]
    %v65 = vld [vmem:[%s2 + $0x10] sm:$0xff]
    %v66 = vld [vmem:[%s2 + $0x18] sm:$0xff]
    %v68 = vsel %vm46, 0.0, 0
    %70 = vmatpush.msra.mxu0 0.0
    %71 = vmatpush.msra.mxu0 0.0
    %72 = vmatpush.msra.mxu0 0.0
    %73 = vmatpush.msra.mxu0 0.0
    %74 = vmatpush.msra.mxu0 0.0
    %75 = vmatpush.msra.mxu0 0.0
    %76 = vmatpush.msra.mxu0 0.0
    %77 = vmatpush.msra.mxu0 0.0
    %78 = vmatpush.msra.mxu0 0.0
    %79 = vmatpush.msra.mxu0 0.0
    %80 = vmatpush.msra.mxu0 0.0
    %81 = vmatpush.msra.mxu0 0.0
    %82 = vmatpush.msra.mxu0 %v66
    %83 = vmatpush.msra.mxu0 %v65
    %84 = vmatpush.msra.mxu0 %v64
    %85 = vmatpush.msra.mxu0 %v63
    %86 = vmatmul.f32.gmra.mxu0 %v68
    %v87 = vpop.f32.mrf.mxu0
    %v88 = vadd.f32 0.0, %v87
    %89 = vdwg.mxu0
    %v90 = vadd.f32 %v60, %v88
    %v91 = vxor.u32 %v90, 2147483648
    %v92 = vmul.f32 %v91, 1.442695
    %v93 = vpow.pop %v92
    %v94 = vadd.f32 %v93, 1.0
    %v95 = vrcp.pop %v94
    %v96 = vmul.f32 %v94, %v95
    %v97 = vsub.f32 1.0, %v96
    %v98 = vmul.f32 %v95, %v97
    %v99 = vadd.f32 %v95, %v98
    %vm100 = vweird.f32 %v94
    %vm101 = vweird.f32 %v95
    %vm102 = vmor %vm100, %vm101
    %v103 = vsel %vm102, %v95, %v99
    %v104 = vand.u32 2147483647, %v94
    %vm105 = vcmp.eq.f32.partialorder %v104, 8.507059e+37
    %v106 = vand.u32 %v94, 2147483648
    %v107 = vor.u32 1.1754944e-38, %v106
    %v108 = vsel %vm105, %v107, %v103
    %v109 = vmul.f32 1.0, %v108
    %v110 = vtanh.pop %v90
    %v111 = vmul.f32 %v109, 0.0
    %113 = vrot.lane.b32.xlu0 %v110, 64
    %v114 = vpop.permute.xlu0 %113
    %v116 = vmul.f32 %v109, %v114
    %118 = vrot.lane.b32.xlu0 %v116, 32
    %v119 = vpop.permute.xlu0 %118
    %v121 = vadd.f32 %v111, %v119
    %v122 = vtanh.pop %v121
    %124 = vrot.lane.b32.xlu0 %v122, 64
    %v125 = vpop.permute.xlu0 %124
    %v127 = vmul.f32 %v109, %v125
    %129 = vrot.lane.b32.xlu0 %v127, 32
    %v130 = vpop.permute.xlu0 %129
    %vm132 = vcmask 253952
    %133 = vst.msk [vmem:[#allocation2] sm:$0x1] %vm132, %v130
    %v134 = vsel %vm46, %v130, 0
    %136 = vmatpush.msra.mxu0 0.0
    %137 = vmatpush.msra.mxu0 0.0
    %138 = vmatpush.msra.mxu0 0.0
    %139 = vmatpush.msra.mxu0 0.0
    %140 = vmatpush.msra.mxu0 0.0
    %141 = vmatpush.msra.mxu0 0.0
    %142 = vmatpush.msra.mxu0 0.0
    %143 = vmatpush.msra.mxu0 0.0
    %144 = vmatpush.msra.mxu0 0.0
    %145 = vmatpush.msra.mxu0 0.0
    %146 = vmatpush.msra.mxu0 0.0
    %147 = vmatpush.msra.mxu0 0.0
    %148 = vmatpush.msra.mxu0 %v66
    %149 = vmatpush.msra.mxu0 %v65
    %150 = vmatpush.msra.mxu0 %v64
    %151 = vmatpush.msra.mxu0 %v63
    %152 = vmatmul.f32.gmra.mxu0 %v134
    %v153 = vpop.f32.mrf.mxu0
    %v154 = vadd.f32 0.0, %v153
    %155 = vdwg.mxu0
    %v157 = vrot.slane %v154, 7
    %v159 = vadd.f32 %v60, %v157
    %v160 = vxor.u32 %v159, 2147483648
    %v161 = vmul.f32 %v160, 1.442695
    %v162 = vpow.pop %v161
    %v163 = vadd.f32 %v162, 1.0
    %v164 = vrcp.pop %v163
    %v165 = vmul.f32 %v163, %v164
    %v166 = vsub.f32 1.0, %v165
    %v167 = vmul.f32 %v164, %v166
    %v168 = vadd.f32 %v164, %v167
    %vm169 = vweird.f32 %v163
    %vm170 = vweird.f32 %v164
    %vm171 = vmor %vm169, %vm170
    %v172 = vsel %vm171, %v164, %v168
    %v173 = vand.u32 2147483647, %v163
    %vm174 = vcmp.eq.f32.partialorder %v173, 8.507059e+37
    %v175 = vand.u32 %v163, 2147483648
    %v176 = vor.u32 1.1754944e-38, %v175
    %v177 = vsel %vm174, %v176, %v172
    %v178 = vmul.f32 1.0, %v177
    %v179 = vtanh.pop %v159
    %v181 = vrot.slane %v121, 7
    %v183 = vmul.f32 %v178, %v181
    %185 = vrot.lane.b32.xlu0 %v179, 64
    %v186 = vpop.permute.xlu0 %185
    %v188 = vmul.f32 %v178, %v186
    %190 = vrot.lane.b32.xlu0 %v188, 32
    %v191 = vpop.permute.xlu0 %190
    %v193 = vadd.f32 %v183, %v191
    %v194 = vtanh.pop %v193
    %196 = vrot.lane.b32.xlu0 %v194, 64
    %v197 = vpop.permute.xlu0 %196
    %v199 = vmul.f32 %v178, %v197
    %201 = vrot.lane.b32.xlu0 %v199, 32
    %v202 = vpop.permute.xlu0 %201
    %vm204 = vcmask 254977
    %205 = vst.msk [vmem:[#allocation2] sm:$0x2] %vm204, %v202
    %v206 = vrot.slane %v199, 1
    %207 = vrot.lane.b32.xlu0 %v206, 32
    %v208 = vpop.permute.xlu0 %207
    %v209 = vsel %vm46, %v208, 0
    %211 = vmatpush.msra.mxu0 0.0
    %212 = vmatpush.msra.mxu0 0.0
    %213 = vmatpush.msra.mxu0 0.0
    %214 = vmatpush.msra.mxu0 0.0
    %215 = vmatpush.msra.mxu0 0.0
    %216 = vmatpush.msra.mxu0 0.0
    %217 = vmatpush.msra.mxu0 0.0
    %218 = vmatpush.msra.mxu0 0.0
    %219 = vmatpush.msra.mxu0 0.0
    %220 = vmatpush.msra.mxu0 0.0
    %221 = vmatpush.msra.mxu0 0.0
    %222 = vmatpush.msra.mxu0 0.0
    %223 = vmatpush.msra.mxu0 %v66
    %224 = vmatpush.msra.mxu0 %v65
    %225 = vmatpush.msra.mxu0 %v64
    %226 = vmatpush.msra.mxu0 %v63
    %227 = vmatmul.f32.gmra.mxu0 %v209
    %v228 = vpop.f32.mrf.mxu0
    %v229 = vadd.f32 0.0, %v228
    %230 = vdwg.mxu0
    %v232 = vrot.slane %v229, 6
    %v234 = vadd.f32 %v60, %v232
    %v235 = vxor.u32 %v234, 2147483648
    %v236 = vmul.f32 %v235, 1.442695
    %v237 = vpow.pop %v236
    %v238 = vadd.f32 %v237, 1.0
    %v239 = vrcp.pop %v238
    %v240 = vmul.f32 %v238, %v239
    %v241 = vsub.f32 1.0, %v240
    %v242 = vmul.f32 %v239, %v241
    %v243 = vadd.f32 %v239, %v242
    %vm244 = vweird.f32 %v238
    %vm245 = vweird.f32 %v239
    %vm246 = vmor %vm244, %vm245
    %v247 = vsel %vm246, %v239, %v243
    %v248 = vand.u32 2147483647, %v238
    %vm249 = vcmp.eq.f32.partialorder %v248, 8.507059e+37
    %v250 = vand.u32 %v238, 2147483648
    %v251 = vor.u32 1.1754944e-38, %v250
    %v252 = vsel %vm249, %v251, %v247
    %v253 = vmul.f32 1.0, %v252
    %v254 = vtanh.pop %v234
    %v256 = vrot.slane %v193, 7
    %v258 = vmul.f32 %v253, %v256
    %260 = vrot.lane.b32.xlu0 %v254, 64
    %v261 = vpop.permute.xlu0 %260
    %v263 = vmul.f32 %v253, %v261
    %265 = vrot.lane.b32.xlu0 %v263, 32
    %v266 = vpop.permute.xlu0 %265
    %v268 = vadd.f32 %v258, %v266
    %v269 = vtanh.pop %v268
    %271 = vrot.lane.b32.xlu0 %v269, 64
    %v272 = vpop.permute.xlu0 %271
    %v274 = vmul.f32 %v253, %v272
    %276 = vrot.lane.b32.xlu0 %v274, 32
    %v277 = vpop.permute.xlu0 %276
    %vm279 = vcmask 256002
    %280 = vst.msk [vmem:[#allocation2] sm:$0x4] %vm279, %v277
    %v281 = vrot.slane %v274, 2
    %282 = vrot.lane.b32.xlu0 %v281, 32
    %v283 = vpop.permute.xlu0 %282
    %v284 = vsel %vm46, %v283, 0
    %286 = vmatpush.msra.mxu0 0.0
    %287 = vmatpush.msra.mxu0 0.0
    %288 = vmatpush.msra.mxu0 0.0
    %289 = vmatpush.msra.mxu0 0.0
    %290 = vmatpush.msra.mxu0 0.0
    %291 = vmatpush.msra.mxu0 0.0
    %292 = vmatpush.msra.mxu0 0.0
    %293 = vmatpush.msra.mxu0 0.0
    %294 = vmatpush.msra.mxu0 0.0
    %295 = vmatpush.msra.mxu0 0.0
    %296 = vmatpush.msra.mxu0 0.0
    %297 = vmatpush.msra.mxu0 0.0
    %298 = vmatpush.msra.mxu0 %v66
    %299 = vmatpush.msra.mxu0 %v65
    %300 = vmatpush.msra.mxu0 %v64
    %301 = vmatpush.msra.mxu0 %v63
    %302 = vmatmul.f32.gmra.mxu0 %v284
    %v303 = vpop.f32.mrf.mxu0
    %v304 = vadd.f32 0.0, %v303
    %305 = vdwg.mxu0
    %v307 = vrot.slane %v304, 5
    %v309 = vadd.f32 %v60, %v307
    %v310 = vxor.u32 %v309, 2147483648
    %v311 = vmul.f32 %v310, 1.442695
    %v312 = vpow.pop %v311
    %v313 = vadd.f32 %v312, 1.0
    %v314 = vrcp.pop %v313
    %v315 = vmul.f32 %v313, %v314
    %v316 = vsub.f32 1.0, %v315
    %v317 = vmul.f32 %v314, %v316
    %v318 = vadd.f32 %v314, %v317
    %vm319 = vweird.f32 %v313
    %vm320 = vweird.f32 %v314
    %vm321 = vmor %vm319, %vm320
    %v322 = vsel %vm321, %v314, %v318
    %v323 = vand.u32 2147483647, %v313
    %vm324 = vcmp.eq.f32.partialorder %v323, 8.507059e+37
    %v325 = vand.u32 %v313, 2147483648
    %v326 = vor.u32 1.1754944e-38, %v325
    %v327 = vsel %vm324, %v326, %v322
    %v328 = vmul.f32 1.0, %v327
    %v329 = vtanh.pop %v309
    %v331 = vrot.slane %v268, 7
    %v333 = vmul.f32 %v328, %v331
    %335 = vrot.lane.b32.xlu0 %v329, 64
    %v336 = vpop.permute.xlu0 %335
    %v338 = vmul.f32 %v328, %v336
    %340 = vrot.lane.b32.xlu0 %v338, 32
    %v341 = vpop.permute.xlu0 %340
    %v343 = vadd.f32 %v333, %v341
    %v344 = vtanh.pop %v343
    %346 = vrot.lane.b32.xlu0 %v344, 64
    %v347 = vpop.permute.xlu0 %346
    %v349 = vmul.f32 %v328, %v347
    %351 = vrot.lane.b32.xlu0 %v349, 32
    %v352 = vpop.permute.xlu0 %351
    %vm354 = vcmask 257027
    %355 = vst.msk [vmem:[#allocation2] sm:$0x8] %vm354, %v352
    %v356 = vrot.slane %v349, 3
    %357 = vrot.lane.b32.xlu0 %v356, 32
    %v358 = vpop.permute.xlu0 %357
    %v359 = vsel %vm46, %v358, 0
    %361 = vmatpush.msra.mxu0 0.0
    %362 = vmatpush.msra.mxu0 0.0
    %363 = vmatpush.msra.mxu0 0.0
    %364 = vmatpush.msra.mxu0 0.0
    %365 = vmatpush.msra.mxu0 0.0
    %366 = vmatpush.msra.mxu0 0.0
    %367 = vmatpush.msra.mxu0 0.0
    %368 = vmatpush.msra.mxu0 0.0
    %369 = vmatpush.msra.mxu0 0.0
    %370 = vmatpush.msra.mxu0 0.0
    %371 = vmatpush.msra.mxu0 0.0
    %372 = vmatpush.msra.mxu0 0.0
    %373 = vmatpush.msra.mxu0 %v66
    %374 = vmatpush.msra.mxu0 %v65
    %375 = vmatpush.msra.mxu0 %v64
    %376 = vmatpush.msra.mxu0 %v63
    %377 = vmatmul.f32.gmra.mxu0 %v359
    %v378 = vpop.f32.mrf.mxu0
    %v379 = vadd.f32 0.0, %v378
    %380 = vdwg.mxu0
    %v382 = vrot.slane %v379, 4
    %v384 = vadd.f32 %v60, %v382
    %v385 = vxor.u32 %v384, 2147483648
    %v386 = vmul.f32 %v385, 1.442695
    %v387 = vpow.pop %v386
    %v388 = vadd.f32 %v387, 1.0
    %v389 = vrcp.pop %v388
    %v390 = vmul.f32 %v388, %v389
    %v391 = vsub.f32 1.0, %v390
    %v392 = vmul.f32 %v389, %v391
    %v393 = vadd.f32 %v389, %v392
    %vm394 = vweird.f32 %v388
    %vm395 = vweird.f32 %v389
    %vm396 = vmor %vm394, %vm395
    %v397 = vsel %vm396, %v389, %v393
    %v398 = vand.u32 2147483647, %v388
    %vm399 = vcmp.eq.f32.partialorder %v398, 8.507059e+37
    %v400 = vand.u32 %v388, 2147483648
    %v401 = vor.u32 1.1754944e-38, %v400
    %v402 = vsel %vm399, %v401, %v397
    %v403 = vmul.f32 1.0, %v402
    %v404 = vtanh.pop %v384
    %v406 = vrot.slane %v343, 7
    %v408 = vmul.f32 %v403, %v406
    %410 = vrot.lane.b32.xlu0 %v404, 64
    %v411 = vpop.permute.xlu0 %410
    %v413 = vmul.f32 %v403, %v411
    %415 = vrot.lane.b32.xlu0 %v413, 32
    %v416 = vpop.permute.xlu0 %415
    %v418 = vadd.f32 %v408, %v416
    %v419 = vtanh.pop %v418
    %421 = vrot.lane.b32.xlu0 %v419, 64
    %v422 = vpop.permute.xlu0 %421
    %v424 = vmul.f32 %v403, %v422
    %426 = vrot.lane.b32.xlu0 %v424, 32
    %v427 = vpop.permute.xlu0 %426
    %vm429 = vcmask 258052
    %430 = vst.msk [vmem:[#allocation2] sm:$0x10] %vm429, %v427
    %v431 = vrot.slane %v424, 4
    %432 = vrot.lane.b32.xlu0 %v431, 32
    %v433 = vpop.permute.xlu0 %432
    %v434 = vsel %vm46, %v433, 0
    %436 = vmatpush.msra.mxu0 0.0
    %437 = vmatpush.msra.mxu0 0.0
    %438 = vmatpush.msra.mxu0 0.0
    %439 = vmatpush.msra.mxu0 0.0
    %440 = vmatpush.msra.mxu0 0.0
    %441 = vmatpush.msra.mxu0 0.0
    %442 = vmatpush.msra.mxu0 0.0
    %443 = vmatpush.msra.mxu0 0.0
    %444 = vmatpush.msra.mxu0 0.0
    %445 = vmatpush.msra.mxu0 0.0
    %446 = vmatpush.msra.mxu0 0.0
    %447 = vmatpush.msra.mxu0 0.0
    %448 = vmatpush.msra.mxu0 %v66
    %449 = vmatpush.msra.mxu0 %v65
    %450 = vmatpush.msra.mxu0 %v64
    %451 = vmatpush.msra.mxu0 %v63
    %452 = vmatmul.f32.gmra.mxu0 %v434
    %v453 = vpop.f32.mrf.mxu0
    %v454 = vadd.f32 0.0, %v453
    %455 = vdwg.mxu0
    %v457 = vrot.slane %v454, 3
    %v459 = vadd.f32 %v60, %v457
    %v460 = vxor.u32 %v459, 2147483648
    %v461 = vmul.f32 %v460, 1.442695
    %v462 = vpow.pop %v461
    %v463 = vadd.f32 %v462, 1.0
    %v464 = vrcp.pop %v463
    %v465 = vmul.f32 %v463, %v464
    %v466 = vsub.f32 1.0, %v465
    %v467 = vmul.f32 %v464, %v466
    %v468 = vadd.f32 %v464, %v467
    %vm469 = vweird.f32 %v463
    %vm470 = vweird.f32 %v464
    %vm471 = vmor %vm469, %vm470
    %v472 = vsel %vm471, %v464, %v468
    %v473 = vand.u32 2147483647, %v463
    %vm474 = vcmp.eq.f32.partialorder %v473, 8.507059e+37
    %v475 = vand.u32 %v463, 2147483648
    %v476 = vor.u32 1.1754944e-38, %v475
    %v477 = vsel %vm474, %v476, %v472
    %v478 = vmul.f32 1.0, %v477
    %v479 = vtanh.pop %v459
    %v481 = vrot.slane %v418, 7
    %v483 = vmul.f32 %v478, %v481
    %485 = vrot.lane.b32.xlu0 %v479, 64
    %v486 = vpop.permute.xlu0 %485
    %v488 = vmul.f32 %v478, %v486
    %490 = vrot.lane.b32.xlu0 %v488, 32
    %v491 = vpop.permute.xlu0 %490
    %v493 = vadd.f32 %v483, %v491
    %v494 = vtanh.pop %v493
    %496 = vrot.lane.b32.xlu0 %v494, 64
    %v497 = vpop.permute.xlu0 %496
    %v499 = vmul.f32 %v478, %v497
    %501 = vrot.lane.b32.xlu0 %v499, 32
    %v502 = vpop.permute.xlu0 %501
    %vm504 = vcmask 259077
    %505 = vst.msk [vmem:[#allocation2] sm:$0x20] %vm504, %v502
    %v506 = vrot.slane %v499, 5
    %507 = vrot.lane.b32.xlu0 %v506, 32
    %v508 = vpop.permute.xlu0 %507
    %v509 = vsel %vm46, %v508, 0
    %511 = vmatpush.msra.mxu0 0.0
    %512 = vmatpush.msra.mxu0 0.0
    %513 = vmatpush.msra.mxu0 0.0
    %514 = vmatpush.msra.mxu0 0.0
    %515 = vmatpush.msra.mxu0 0.0
    %516 = vmatpush.msra.mxu0 0.0
    %517 = vmatpush.msra.mxu0 0.0
    %518 = vmatpush.msra.mxu0 0.0
    %519 = vmatpush.msra.mxu0 0.0
    %520 = vmatpush.msra.mxu0 0.0
    %521 = vmatpush.msra.mxu0 0.0
    %522 = vmatpush.msra.mxu0 0.0
    %523 = vmatpush.msra.mxu0 %v66
    %524 = vmatpush.msra.mxu0 %v65
    %525 = vmatpush.msra.mxu0 %v64
    %526 = vmatpush.msra.mxu0 %v63
    %527 = vmatmul.f32.gmra.mxu0 %v509
    %v528 = vpop.f32.mrf.mxu0
    %v529 = vadd.f32 0.0, %v528
    %530 = vdwg.mxu0
    %v532 = vrot.slane %v529, 2
    %v534 = vadd.f32 %v60, %v532
    %v535 = vxor.u32 %v534, 2147483648
    %v536 = vmul.f32 %v535, 1.442695
    %v537 = vpow.pop %v536
    %v538 = vadd.f32 %v537, 1.0
    %v539 = vrcp.pop %v538
    %v540 = vmul.f32 %v538, %v539
    %v541 = vsub.f32 1.0, %v540
    %v542 = vmul.f32 %v539, %v541
    %v543 = vadd.f32 %v539, %v542
    %vm544 = vweird.f32 %v538
    %vm545 = vweird.f32 %v539
    %vm546 = vmor %vm544, %vm545
    %v547 = vsel %vm546, %v539, %v543
    %v548 = vand.u32 2147483647, %v538
    %vm549 = vcmp.eq.f32.partialorder %v548, 8.507059e+37
    %v550 = vand.u32 %v538, 2147483648
    %v551 = vor.u32 1.1754944e-38, %v550
    %v552 = vsel %vm549, %v551, %v547
    %v553 = vmul.f32 1.0, %v552
    %v554 = vtanh.pop %v534
    %v556 = vrot.slane %v493, 7
    %v558 = vmul.f32 %v553, %v556
    %560 = vrot.lane.b32.xlu0 %v554, 64
    %v561 = vpop.permute.xlu0 %560
    %v563 = vmul.f32 %v553, %v561
    %565 = vrot.lane.b32.xlu0 %v563, 32
    %v566 = vpop.permute.xlu0 %565
    %v568 = vadd.f32 %v558, %v566
    %v569 = vtanh.pop %v568
    %571 = vrot.lane.b32.xlu0 %v569, 64
    %v572 = vpop.permute.xlu0 %571
    %v574 = vmul.f32 %v553, %v572
    %576 = vrot.lane.b32.xlu0 %v574, 32
    %v577 = vpop.permute.xlu0 %576
    %vm579 = vcmask 260102
    %580 = vst.msk [vmem:[#allocation2] sm:$0x40] %vm579, %v577
    %v581 = vrot.slane %v574, 6
    %582 = vrot.lane.b32.xlu0 %v581, 32
    %v583 = vpop.permute.xlu0 %582
    %v584 = vsel %vm46, %v583, 0
    %586 = vmatpush.msra.mxu0 0.0
    %587 = vmatpush.msra.mxu0 0.0
    %588 = vmatpush.msra.mxu0 0.0
    %589 = vmatpush.msra.mxu0 0.0
    %590 = vmatpush.msra.mxu0 0.0
    %591 = vmatpush.msra.mxu0 0.0
    %592 = vmatpush.msra.mxu0 0.0
    %593 = vmatpush.msra.mxu0 0.0
    %594 = vmatpush.msra.mxu0 0.0
    %595 = vmatpush.msra.mxu0 0.0
    %596 = vmatpush.msra.mxu0 0.0
    %597 = vmatpush.msra.mxu0 0.0
    %598 = vmatpush.msra.mxu0 %v66
    %599 = vmatpush.msra.mxu0 %v65
    %600 = vmatpush.msra.mxu0 %v64
    %601 = vmatpush.msra.mxu0 %v63
    %602 = vmatmul.f32.gmra.mxu0 %v584
    %v603 = vpop.f32.mrf.mxu0
    %v604 = vadd.f32 0.0, %v603
    %605 = vdwg.mxu0
    %v607 = vrot.slane %v604, 1
    %v609 = vadd.f32 %v60, %v607
    %v610 = vxor.u32 %v609, 2147483648
    %v611 = vmul.f32 %v610, 1.442695
    %v612 = vpow.pop %v611
    %v613 = vadd.f32 %v612, 1.0
    %v614 = vrcp.pop %v613
    %v615 = vmul.f32 %v613, %v614
    %v616 = vsub.f32 1.0, %v615
    %v617 = vmul.f32 %v614, %v616
    %v618 = vadd.f32 %v614, %v617
    %vm619 = vweird.f32 %v613
    %vm620 = vweird.f32 %v614
    %vm621 = vmor %vm619, %vm620
    %v622 = vsel %vm621, %v614, %v618
    %v623 = vand.u32 2147483647, %v613
    %vm624 = vcmp.eq.f32.partialorder %v623, 8.507059e+37
    %v625 = vand.u32 %v613, 2147483648
    %v626 = vor.u32 1.1754944e-38, %v625
    %v627 = vsel %vm624, %v626, %v622
    %v628 = vmul.f32 1.0, %v627
    %v629 = vtanh.pop %v609
    %v631 = vrot.slane %v568, 7
    %v633 = vmul.f32 %v628, %v631
    %635 = vrot.lane.b32.xlu0 %v629, 64
    %v636 = vpop.permute.xlu0 %635
    %v638 = vmul.f32 %v628, %v636
    %640 = vrot.lane.b32.xlu0 %v638, 32
    %v641 = vpop.permute.xlu0 %640
    %v643 = vadd.f32 %v633, %v641
    %v644 = vtanh.pop %v643
    %646 = vrot.lane.b32.xlu0 %v644, 64
    %v647 = vpop.permute.xlu0 %646
    %v649 = vmul.f32 %v628, %v647
    %651 = vrot.lane.b32.xlu0 %v649, 32
    %v652 = vpop.permute.xlu0 %651
    %vm654 = vcmask 261127
    %655 = vst.msk [vmem:[#allocation2] sm:$0x80] %vm654, %v652
    %v656 = vld [vmem:[#allocation2] sm:$0xff]
    %v657 = vpack.c.bf16 %v656, %v656
    %v658 = vld [vmem:[%s4] sm:$0xf]
    %v659 = vld [vmem:[%s4 + $0x4] sm:$0xf]
    %v660 = vld [vmem:[%s4 + $0x8] sm:$0xf]
    %v661 = vld [vmem:[%s4 + $0xc] sm:$0xf]
    %v662 = vld [vmem:[%s5] sm:$0x1]
    %v664 = vperm.slane %v662, 0
    %v670 = vunpack.c.l.b16 %v658
    %v671 = vunpack.c.l.b16 %v659
    %v672 = vunpack.c.l.b16 %v660
    %v673 = vunpack.c.l.b16 %v661
    %v674 = vpack.c.b16 %v671, %v670
    %v675 = vpack.c.b16 %v673, %v672
    %v679 = vsel %vm46, %v657, 0
    %681 = vmatpush.bf16.msra.mxu0 0
    %682 = vmatpush.bf16.msra.mxu0 0
    %683 = vmatpush.bf16.msra.mxu0 0
    %684 = vmatpush.bf16.msra.mxu0 0
    %685 = vmatpush.bf16.msra.mxu0 0
    %686 = vmatpush.bf16.msra.mxu0 0
    %687 = vmatpush.bf16.msra.mxu0 %v675
    %688 = vmatpush.bf16.msra.mxu0 %v674
    %689 = vmatmul.bf16.gmra.mxu0 %v679
    %v690 = vpop.f32.mrf.mxu0
    %v691 = vadd.f32 %v664, %v690
    %v692 = vpop.f32.mrf.mxu0
    %693 = vdwg.mxu0
    %694 = vmax.xlane.f32.xlu0 %v691
    %v695 = vpop.xlane.xlu0 %694
    %v696 = vsub.f32 %v691, %v695
    %v697 = vmul.f32 %v696, 1.442695
    %v698 = vpow.pop %v697
    %699 = vadd.xlane.f32.xlu0 %v698
    %v700 = vpop.xlane.xlu0 %699
    %v701 = vlog2.pop %v700
    %v702 = vmul.f32 %v701, 0.6931472
    %v703 = vadd.f32 %v702, %v695
    %v704 = vsub.f32 %v691, %v703
    %705 = vst [vmem:[#allocation3] sm:$0xff] %v704
    // Predicated region
    $region26: #{lstm_split_forward.1} parent=1 // pred_check
      _
    $region27: #{lstm_split_forward.1} parent=1 // pred_check_branch
      %707 = sbr.rel (0) target = $region29
    $region28: #{lstm_split_forward.1} parent=1 // pred_region
      %709 = vsyncadd [#allocation4], 0
      %s711 = sshll.u32 [#allocation3], 4
      %s712 = int_to_ptr.vmem [resolvable:$true] %s711
      %s713 = sshll.u32 %s6, 4
      %s714 = int_to_ptr.hbm [resolvable:$true] %s713
      %716 = dma.vmem_to_hbm [thread:$0]  %s712, 128, %s714, [#allocation4]
    $region29: #{lstm_split_forward.1} parent=1 // pred_fallthru
      _
    // Predicated region
    $region30: #{lstm_split_forward.1} parent=1 // pred_check
      _
    $region31: #{lstm_split_forward.1} parent=1 // pred_check_branch
      %718 = sbr.rel (0) target = $region33
    $region32: #{lstm_split_forward.1} parent=1 // pred_region
      %720 = dma.done [#allocation4], 128
    $region33: #{lstm_split_forward.1} parent=1 // pred_fallthru
      _
    %721 = vsyncpa [#allocation4], 1

</llo_original>
